<compile_context>
chip_gen: v7x
topology: tpu7x:2x2x1
jax: 0.10.0
libtpu: 0.0.40
codegen_flags: <defaults>
</compile_context>

<pallas_src>
import functools

import jax
import jax.numpy as jnp
from jax import lax
from jax.experimental import pallas as pl
from jax.experimental.pallas import tpu as pltpu

BN_EPS = 0.8          # nn.BatchNorm2d(out_size, 0.8) -> eps = 0.8
LRELU_SLOPE = 0.2
LANE = 128
VMEM_LIMIT = 48 * 1024 * 1024   # < 64 MiB physical on v7x, headroom left


def _round_up(x, m):
    return (x + m - 1) // m * m


def _conv_stats_kernel(phx_ref, w_ref, mask_ref, y_ref, st_ref, *, r, wph):
    """Pass 1: direct conv (4 phase-stacked shifted matmuls) + BN partials.

    phx_ref : [1, Lp, 4*Cin] bf16  phase-stacked padded input (one image);
                                   channel block pi = (kh%2)*2 + (kw%2)
    w_ref   : [4, 4*Cin, Cp] bf16  per-offset weights (o = (kh//2)*2 + kw//2),
                                   C_out zero-padded to Cp
    mask_ref: [R, 1]         f32   1.0 for valid rows, 0.0 for wrap columns
    y_ref   : [1, R, Cp]     bf16  conv rows (R = Ho*Wph, lane-dense Cp)
    st_ref  : [1, 2, Cp]     f32   per-image [sum, sum_sq] over valid rows
    """
    acc = None
    for a in range(2):          # kh // 2
        for b in range(2):      # kw // 2
            off = a * wph + b   # row shift in the flat phase layout
            xs = phx_ref[0, pl.ds(off, r), :]               # [R, 4*Cin] bf16
            part = jnp.dot(xs, w_ref[a * 2 + b],
                           preferred_element_type=jnp.float32)
            acc = part if acc is None else acc + part       # [R, Cp] f32

    # Rows whose output column == Wo are wrap-around garbage -> masked out of
    # the batch statistics (single-pass sum / sum-of-squares form).
    yv = acc * mask_ref[...]
    st_ref[0, 0:1, :] = jnp.sum(yv, axis=0, keepdims=True)
    st_ref[0, 1:2, :] = jnp.sum(yv * acc, axis=0, keepdims=True)
    y_ref[...] = acc[None].astype(y_ref.dtype)


def _bn_lrelu_kernel(y_ref, scale_ref, shift_ref, o_ref):
    """Pass 2: BN folded to one FMA (y*scale + shift) + LeakyReLU(0.2)."""
    z = y_ref[...].astype(jnp.float32) * scale_ref[...] + shift_ref[...]
    o_ref[...] = jnp.where(z > 0, z, LRELU_SLOPE * z).astype(o_ref.dtype)


def unet_down(x, conv_w, gamma, beta, *, tile_rows=1024):
    """x: [N, C_in, H, W] NCHW f32; conv_w: [C_out, C_in, 4, 4]; gamma/beta: [C_out]."""
    n, c_in, h, w = x.shape
    c_out = conv_w.shape[0]
    assert h % 2 == 0 and w % 2 == 0, "UNetDown expects even spatial dims"
    ho, wo = h // 2, w // 2
    hph, wph = ho + 2, wo + 1        # +2 rows: conv halo + flat-offset spare
    r = ho * wph                     # conv rows per image (incl. wrap column)
    lp = hph * wph
    cin4 = 4 * c_in                  # stacked phase channels
    cp = max(LANE, _round_up(c_out, LANE))   # lane-dense channel dim

    # ---- host-side layout prep (single same-size copy; no im2col) ----------
    # NCHW -> zero-padded NHWC -> 2x2 stride phases stacked along channels:
    # phx[n, hi*Wph + wi, (hp*2+wp)*Cin + c] = padded[n, 2*hi+hp, 2*wi+wp, c].
    x_nhwc = jnp.transpose(x, (0, 2, 3, 1))
    xp = jnp.pad(x_nhwc, ((0, 0), (1, 3), (1, 1), (0, 0)))
    phx = xp.reshape(n, hph, 2, wph, 2, c_in).transpose(0, 1, 3, 2, 4, 5)
    phx = phx.reshape(n, lp, cin4).astype(jnp.bfloat16)

    # Per-offset weights [4, 4*Cin, Cp]: offset o = (kh//2)*2 + (kw//2), the
    # 4*Cin axis is (kh%2, kw%2, cin) to match the phase stacking above.
    w_t = jnp.transpose(conv_w, (2, 3, 1, 0))                 # [kh, kw, cin, cout]
    w_t = w_t.reshape(2, 2, 2, 2, c_in, c_out)                # [a, ph_h, b, ph_w, ...]
    w_t = w_t.transpose(0, 2, 1, 3, 4, 5).reshape(4, cin4, c_out)
    w_t = jnp.pad(w_t, ((0, 0), (0, 0), (0, cp - c_out))).astype(jnp.bfloat16)

    # Validity mask for the wrap column (output col index == Wo).
    row_mask = ((jnp.arange(r) % wph) < wo).astype(jnp.float32).reshape(r, 1)

    # ---- pass 1: conv-as-matmuls + fused BN partial statistics -------------
    y, stats = pl.pallas_call(
        functools.partial(_conv_stats_kernel, r=r, wph=wph),
        out_shape=(jax.ShapeDtypeStruct((n, r, cp), jnp.bfloat16),
                   jax.ShapeDtypeStruct((n, 2, cp), jnp.float32)),
        grid_spec=pltpu.PrefetchScalarGridSpec(
            num_scalar_prefetch=0,
            grid=(n,),
            in_specs=[
                pl.BlockSpec((1, lp, cin4), lambda i: (i, 0, 0)),
                pl.BlockSpec((4, cin4, cp), lambda i: (0, 0, 0)),
                pl.BlockSpec((r, 1), lambda i: (0, 0)),
            ],
            out_specs=[
                pl.BlockSpec((1, r, cp), lambda i: (i, 0, 0)),
                pl.BlockSpec((1, 2, cp), lambda i: (i, 0, 0)),
            ],
        ),
        compiler_params=pltpu.CompilerParams(
            dimension_semantics=("parallel",),
            vmem_limit_bytes=VMEM_LIMIT),
    )(phx, w_t, row_mask)

    # ---- finalize BN stats (tiny [2, Cp] math) & fold gamma/beta -----------
    m_valid = n * ho * wo
    tot = jnp.sum(stats, axis=0)                     # [2, Cp]
    mean = tot[0] / m_valid
    var = jnp.maximum(tot[1] / m_valid - mean * mean, 0.0)
    gamma_p = jnp.pad(gamma.astype(jnp.float32), (0, cp - c_out))
    beta_p = jnp.pad(beta.astype(jnp.float32), (0, cp - c_out))
    scale = gamma_p * lax.rsqrt(var + BN_EPS)        # [Cp]
    shift = beta_p - mean * scale                    # [Cp]
    scale = scale.reshape(1, cp)
    shift = shift.reshape(1, cp)

    # ---- pass 2: normalize + LeakyReLU, tiled over rows (parallel) ---------
    nr = n * r
    tm = min(tile_rows, _round_up(nr, 8))
    out2 = pl.pallas_call(
        _bn_lrelu_kernel,
        out_shape=jax.ShapeDtypeStruct((nr, cp), jnp.float32),
        grid_spec=pltpu.PrefetchScalarGridSpec(
            num_scalar_prefetch=0,
            grid=(pl.cdiv(nr, tm),),
            in_specs=[
                pl.BlockSpec((tm, cp), lambda i: (i, 0)),
                pl.BlockSpec((1, cp), lambda i: (0, 0)),
                pl.BlockSpec((1, cp), lambda i: (0, 0)),
            ],
            out_specs=pl.BlockSpec((tm, cp), lambda i: (i, 0)),
        ),
        compiler_params=pltpu.CompilerParams(
            dimension_semantics=("parallel",),
            vmem_limit_bytes=VMEM_LIMIT),
    )(y.reshape(nr, cp), scale, shift)

    # ---- drop wrap column / channel padding, back to NCHW ------------------
    out = out2.reshape(n, ho, wph, cp)[:, :, :wo, :c_out]
    return jnp.transpose(out, (0, 3, 1, 2))


def _reference(x, conv_w, gamma, beta):
    y = lax.conv_general_dilated(
        x.astype(jnp.float32), conv_w.astype(jnp.float32),
        window_strides=(2, 2), padding=((1, 1), (1, 1)),
        dimension_numbers=("NCHW", "OIHW", "NCHW"),
        precision=lax.Precision.HIGHEST)
    mean = jnp.mean(y, axis=(0, 2, 3), keepdims=True)
    var = jnp.mean((y - mean) ** 2, axis=(0, 2, 3), keepdims=True)
    y = (y - mean) * lax.rsqrt(var + BN_EPS)
    y = y * gamma.reshape(1, -1, 1, 1) + beta.reshape(1, -1, 1, 1)
    return jnp.where(y > 0, y, LRELU_SLOPE * y)


if __name__ == "__main__":
    key = jax.random.PRNGKey(0)
    k_x, k_w = jax.random.split(key)

    N, C_IN, C_OUT, H, W = 2, 4, 8, 16, 16
    x = jax.random.normal(k_x, (N, C_IN, H, W), dtype=jnp.float32)
    # Deterministic synthetic params (PyTorch BN default init: gamma=1, beta=0).
    conv_w = 0.05 * jax.random.normal(k_w, (C_OUT, C_IN, 4, 4), dtype=jnp.float32)
    gamma = jnp.ones((C_OUT,), dtype=jnp.float32)
    beta = jnp.zeros((C_OUT,), dtype=jnp.float32)

    out = jax.block_until_ready(unet_down(x, conv_w, gamma, beta))
    ref = _reference(x, conv_w, gamma, beta)

    assert out.shape == (N, C_OUT, H // 2, W // 2)
    # bf16 MXU inputs + bf16 conv intermediate -> compare at bf16-level tolerance.
    err = float(jnp.max(jnp.abs(out - ref)))
    assert jnp.allclose(out, ref, atol=2e-2, rtol=2e-2), f"max abs err {err}"
    print("KERNEL_OK")
</pallas_src>

<mosaic_0001>
module attributes {stable_mosaic.version = 11 : i64} {
  func.func @_conv_stats_kernel(%arg0: i32, %arg1: memref<1x90x16xbf16, #tpu.memory_space<vmem>>, %arg2: memref<4x16x128xbf16, #tpu.memory_space<vmem>>, %arg3: memref<72x1xf32, #tpu.memory_space<vmem>>, %arg4: memref<1x72x128xbf16, #tpu.memory_space<vmem>>, %arg5: memref<1x2x128xf32, #tpu.memory_space<vmem>>) attributes {dimension_semantics = [#tpu.dimension_semantics<parallel>], iteration_bounds = array<i64: 2>, scalar_prefetch = 0 : i64, scratch_operands = 0 : i64, tpu.core_type = #tpu.core_type<tc>, window_params = [{transform_indices = @transform_0, window_bounds = array<i64: 1, 90, 16>}, {pipeline_mode = #tpu.pipeline_mode<synchronous>, transform_indices = @transform_1, window_bounds = array<i64: 4, 16, 128>}, {pipeline_mode = #tpu.pipeline_mode<synchronous>, transform_indices = @transform_2, window_bounds = array<i64: 72, 1>}, {transform_indices = @transform_3, window_bounds = array<i64: 1, 72, 128>}, {transform_indices = @transform_4, window_bounds = array<i64: 1, 2, 128>}]} {
    %c0 = arith.constant 0 : index
    %c0_0 = arith.constant 0 : index
    %c0_1 = arith.constant 0 : index
    %0 = vector.load %arg1[%c0, %c0_0, %c0_1] : memref<1x90x16xbf16, #tpu.memory_space<vmem>>, vector<1x72x16xbf16>
    %1 = vector.shape_cast %0 : vector<1x72x16xbf16> to vector<72x16xbf16>
    %c0_2 = arith.constant 0 : index
    %c0_3 = arith.constant 0 : index
    %c0_4 = arith.constant 0 : index
    %2 = vector.load %arg2[%c0_2, %c0_3, %c0_4] : memref<4x16x128xbf16, #tpu.memory_space<vmem>>, vector<1x16x128xbf16>
    %3 = vector.shape_cast %2 : vector<1x16x128xbf16> to vector<16x128xbf16>
    %cst = arith.constant dense<0.000000e+00> : vector<72x128xf32>
    %4 = tpu.matmul %1, %3, %cst {dimension_numbers = #tpu.dot_dimension_numbers<[1], [0], [0], [1], [0, 0, 1, 1], [], []>} : vector<72x16xbf16>, vector<16x128xbf16>, vector<72x128xf32> -> vector<72x128xf32>
    %c0_5 = arith.constant 0 : index
    %c1 = arith.constant 1 : index
    %c0_6 = arith.constant 0 : index
    %5 = vector.load %arg1[%c0_5, %c1, %c0_6] : memref<1x90x16xbf16, #tpu.memory_space<vmem>>, vector<1x72x16xbf16>
    %6 = vector.shape_cast %5 : vector<1x72x16xbf16> to vector<72x16xbf16>
    %c1_7 = arith.constant 1 : index
    %c0_8 = arith.constant 0 : index
    %c0_9 = arith.constant 0 : index
    %7 = vector.load %arg2[%c1_7, %c0_8, %c0_9] : memref<4x16x128xbf16, #tpu.memory_space<vmem>>, vector<1x16x128xbf16>
    %8 = vector.shape_cast %7 : vector<1x16x128xbf16> to vector<16x128xbf16>
    %cst_10 = arith.constant dense<0.000000e+00> : vector<72x128xf32>
    %9 = tpu.matmul %6, %8, %cst_10 {dimension_numbers = #tpu.dot_dimension_numbers<[1], [0], [0], [1], [0, 0, 1, 1], [], []>} : vector<72x16xbf16>, vector<16x128xbf16>, vector<72x128xf32> -> vector<72x128xf32>
    %10 = arith.addf %4, %9 : vector<72x128xf32>
    %c0_11 = arith.constant 0 : index
    %c9 = arith.constant 9 : index
    %c0_12 = arith.constant 0 : index
    %11 = vector.load %arg1[%c0_11, %c9, %c0_12] : memref<1x90x16xbf16, #tpu.memory_space<vmem>>, vector<1x72x16xbf16>
    %12 = vector.shape_cast %11 : vector<1x72x16xbf16> to vector<72x16xbf16>
    %c2 = arith.constant 2 : index
    %c0_13 = arith.constant 0 : index
    %c0_14 = arith.constant 0 : index
    %13 = vector.load %arg2[%c2, %c0_13, %c0_14] : memref<4x16x128xbf16, #tpu.memory_space<vmem>>, vector<1x16x128xbf16>
    %14 = vector.shape_cast %13 : vector<1x16x128xbf16> to vector<16x128xbf16>
    %cst_15 = arith.constant dense<0.000000e+00> : vector<72x128xf32>
    %15 = tpu.matmul %12, %14, %cst_15 {dimension_numbers = #tpu.dot_dimension_numbers<[1], [0], [0], [1], [0, 0, 1, 1], [], []>} : vector<72x16xbf16>, vector<16x128xbf16>, vector<72x128xf32> -> vector<72x128xf32>
    %16 = arith.addf %10, %15 : vector<72x128xf32>
    %c0_16 = arith.constant 0 : index
    %c10 = arith.constant 10 : index
    %c0_17 = arith.constant 0 : index
    %17 = vector.load %arg1[%c0_16, %c10, %c0_17] : memref<1x90x16xbf16, #tpu.memory_space<vmem>>, vector<1x72x16xbf16>
    %18 = vector.shape_cast %17 : vector<1x72x16xbf16> to vector<72x16xbf16>
    %c3 = arith.constant 3 : index
    %c0_18 = arith.constant 0 : index
    %c0_19 = arith.constant 0 : index
    %19 = vector.load %arg2[%c3, %c0_18, %c0_19] : memref<4x16x128xbf16, #tpu.memory_space<vmem>>, vector<1x16x128xbf16>
    %20 = vector.shape_cast %19 : vector<1x16x128xbf16> to vector<16x128xbf16>
    %cst_20 = arith.constant dense<0.000000e+00> : vector<72x128xf32>
    %21 = tpu.matmul %18, %20, %cst_20 {dimension_numbers = #tpu.dot_dimension_numbers<[1], [0], [0], [1], [0, 0, 1, 1], [], []>} : vector<72x16xbf16>, vector<16x128xbf16>, vector<72x128xf32> -> vector<72x128xf32>
    %22 = arith.addf %16, %21 : vector<72x128xf32>
    %c0_21 = arith.constant 0 : index
    %c0_22 = arith.constant 0 : index
    %23 = vector.load %arg3[%c0_21, %c0_22] : memref<72x1xf32, #tpu.memory_space<vmem>>, vector<72x1xf32>
    %24 = vector.broadcast %23 : vector<72x1xf32> to vector<72x128xf32>
    %25 = arith.mulf %22, %24 : vector<72x128xf32>
    %cst_23 = arith.constant dense<0.000000e+00> : vector<128xf32>
    %26 = vector.multi_reduction <add>, %25, %cst_23 [0] : vector<72x128xf32> to vector<128xf32>
    %27 = vector.shape_cast %26 : vector<128xf32> to vector<1x128xf32>
    %c0_24 = arith.constant 0 : index
    %c0_25 = arith.constant 0 : index
    %c0_26 = arith.constant 0 : index
    %28 = vector.load %arg5[%c0_24, %c0_25, %c0_26] : memref<1x2x128xf32, #tpu.memory_space<vmem>>, vector<1x1x128xf32>
    %29 = vector.shape_cast %28 : vector<1x1x128xf32> to vector<1x128xf32>
    %30 = vector.shape_cast %27 : vector<1x128xf32> to vector<1x1x128xf32>
    tpu.vector_store %arg5[%c0_24, %c0_25, %c0_26], %30 {strides = array<i32>} : memref<1x2x128xf32, #tpu.memory_space<vmem>>, vector<1x1x128xf32>,
    %31 = arith.mulf %25, %22 : vector<72x128xf32>
    %cst_27 = arith.constant dense<0.000000e+00> : vector<128xf32>
    %32 = vector.multi_reduction <add>, %31, %cst_27 [0] : vector<72x128xf32> to vector<128xf32>
    %33 = vector.shape_cast %32 : vector<128xf32> to vector<1x128xf32>
    %c0_28 = arith.constant 0 : index
    %c1_29 = arith.constant 1 : index
    %c0_30 = arith.constant 0 : index
    %34 = vector.load %arg5[%c0_28, %c1_29, %c0_30] : memref<1x2x128xf32, #tpu.memory_space<vmem>>, vector<1x1x128xf32>
    %35 = vector.shape_cast %34 : vector<1x1x128xf32> to vector<1x128xf32>
    %36 = vector.shape_cast %33 : vector<1x128xf32> to vector<1x1x128xf32>
    tpu.vector_store %arg5[%c0_28, %c1_29, %c0_30], %36 {strides = array<i32>} : memref<1x2x128xf32, #tpu.memory_space<vmem>>, vector<1x1x128xf32>,
    %37 = vector.shape_cast %22 : vector<72x128xf32> to vector<1x72x128xf32>
    %38 = arith.truncf %37 : vector<1x72x128xf32> to vector<1x72x128xbf16>
    %c0_31 = arith.constant 0 : index
    %c0_32 = arith.constant 0 : index
    %c0_33 = arith.constant 0 : index
    %39 = vector.load %arg4[%c0_31, %c0_32, %c0_33] : memref<1x72x128xbf16, #tpu.memory_space<vmem>>, vector<1x72x128xbf16>
    tpu.vector_store %arg4[%c0_31, %c0_32, %c0_33], %38 {strides = array<i32>} : memref<1x72x128xbf16, #tpu.memory_space<vmem>>, vector<1x72x128xbf16>,
    return
  }
  func.func @transform_0(%arg0: i32) -> (i32, i32, i32) {
    %c0_i32 = arith.constant 0 : i32
    %c0_i32_0 = arith.constant 0 : i32
    %c0_i32_1 = arith.constant 0 : i32
    return %arg0, %c0_i32, %c0_i32_0 : i32, i32, i32
  }
  func.func @transform_1(%arg0: i32) -> (i32, i32, i32) {
    %c0_i32 = arith.constant 0 : i32
    %c0_i32_0 = arith.constant 0 : i32
    %c0_i32_1 = arith.constant 0 : i32
    %c0_i32_2 = arith.constant 0 : i32
    return %c0_i32, %c0_i32_0, %c0_i32_1 : i32, i32, i32
  }
  func.func @transform_2(%arg0: i32) -> (i32, i32) {
    %c0_i32 = arith.constant 0 : i32
    %c0_i32_0 = arith.constant 0 : i32
    %c0_i32_1 = arith.constant 0 : i32
    return %c0_i32, %c0_i32_0 : i32, i32
  }
  func.func @transform_3(%arg0: i32) -> (i32, i32, i32) {
    %c0_i32 = arith.constant 0 : i32
    %c0_i32_0 = arith.constant 0 : i32
    %c0_i32_1 = arith.constant 0 : i32
    return %arg0, %c0_i32, %c0_i32_0 : i32, i32, i32
  }
  func.func @transform_4(%arg0: i32) -> (i32, i32, i32) {
    %c0_i32 = arith.constant 0 : i32
    %c0_i32_0 = arith.constant 0 : i32
    %c0_i32_1 = arith.constant 0 : i32
    return %arg0, %c0_i32, %c0_i32_0 : i32, i32, i32
  }
}

</mosaic_0001>

<llo_original>
// kernel: tpu_custom_call.1
$region0: #{tpu_custom_call.1}
  #allocation0 [shape = 'u32[]', space=smem, size = 0x4, offset = 0x4, fixed_abs, tag = 'smem constant byte address 0x4 - core index']
  #allocation1 [shape = 'u32[144,128]{1,0:T(1,128)}', space=vmem, size = 0x12000, scoped, tag = 'internal scratch']
  %s0 = inlined_call_operand.vmem [shape: bf16[2,90,16], index: 0, kind: input, shape index: {}]
  %s1 = inlined_call_operand.vmem [shape: bf16[4,16,128], index: 1, kind: input, shape index: {}]
  %s2 = inlined_call_operand.vmem [shape: f32[72,1], index: 2, kind: input, shape index: {}]
  %s3 = inlined_call_operand.hbm [shape: bf16[2,72,128], index: 3, kind: output, shape index: {0}]
  %s4 = inlined_call_operand.hbm [shape: f32[2,2,128], index: 4, kind: output, shape index: {1}]
  %5 = xla_tuple %s3, %s4
  %s6 = sld [smem:[#allocation0]]
  $region53: #{tpu_custom_call.1} parent=0
    _
  %s8 = ssub.s32 1, %s6
  %s9 = scalar_select 0, %s8, %s6
  $region1: #{tpu_custom_call.1} parent=0
    #allocation2 [shape = 'u8[36864]{0}', space=vmem, size = 0x9000, scoped, tag = 'output window, operand 0']
    #allocation3 [shape = 's32[2]{0}', space=sflag, size = 0x8, scoped, tag = 'scoped memory for tpu_custom_call.1']
    #allocation4 [shape = 'u8[2048]{0}', space=vmem, size = 0x800, scoped, tag = 'output window, operand 1']
    #allocation5 [shape = 's32[2]{0}', space=sflag, size = 0x8, scoped, tag = 'scoped memory for tpu_custom_call.1']
    %10 = vsyncpa [#allocation3], 0
    %s11 = scalar_lea.sflag [#allocation3], 1
    %12 = vsyncpa %s11, 0
    %13 = vsyncpa [#allocation5], 0
    %s14 = scalar_lea.sflag [#allocation5], 1
    %15 = vsyncpa %s14, 0
    loop: start=0, step=1, limit=4
    $region2: #{tpu_custom_call.1} parent=1 // loop_pre_header
      _
    $region3: #{tpu_custom_call.1} parent=1 // loop_header
      %s17 = sphi 0, %s21
      %p18 = scmp.ge.s32.totalorder %s17, 4
      %s27 = sphi 0, %s29
      %s30 = sphi 0, %s27
      %s31 = sphi 0, %s30
      %s47 = sphi 0, %s31
      %s51 = sphi 0, %s51
      %s53 = sphi 0, %s51
      %s54 = sphi 0, %s53
      %s68 = sphi 0, %s54
      %s72 = sphi 0, %s72
      %s74 = sphi 0, %s72
      %s75 = sphi 0, %s74
      %s89 = sphi 0, %s75
      %s95 = sphi 0, %s97
      %s98 = sphi 0, %s95
      %s99 = sphi 0, %s98
      %s115 = sphi 0, %s99
      %s121 = sphi 0, %s123
      %s124 = sphi 0, %s121
      %s125 = sphi 0, %s124
      %s141 = sphi 0, %s125
    $region4: #{tpu_custom_call.1} parent=1 // loop_header_branch
      %20 = sbr.rel (%p18) target = $region8
    $region5: #{tpu_custom_call.1} parent=1 // loop_body
      %s22 = ssub.s32 %s17, 1
      %s23 = ssub.s32 %s17, 2
      %s24 = sadd.s32 %s17, 1
      %s25 = ssub.s32 %s17, %s24
      %p26 = scmp.eq.s32.totalorder %s25, 0
      %s28 = sadd.s32 %s27, 1
      %s29 = scalar_select %p26, %s27, %s28
      %p32 = pneg %p26
      %p33 = scmp.eq.s32.totalorder %s17, 1
      %p34 = por %p32, %p33
      %p35 = scmp.ne.s32.totalorder %s27, %s30
      %p36 = scmp.eq.s32.totalorder %s17, 0
      %p37 = por %p35, %p36
      %p38 = scmp.ne.s32.totalorder %s27, %s30
      %p39 = scmp.eq.s32.totalorder %s22, 1
      %p40 = por %p38, %p39
      %p41 = scmp.ne.s32.totalorder %s30, %s31
      %p42 = scmp.eq.s32.totalorder %s22, 0
      %p43 = por %p41, %p42
      %p44 = scmp.ne.s32.totalorder %s30, %s31
      %p45 = scmp.eq.s32.totalorder %s23, 1
      %p46 = por %p44, %p45
      %p48 = scmp.ne.s32.totalorder %s31, %s47
      %p49 = scmp.eq.s32.totalorder %s23, 0
      %p50 = por %p48, %p49
      %s52 = sadd.s32 %s51, 1
      %p55 = scmp.eq.s32.totalorder %s17, 1
      %p56 = scmp.ne.s32.totalorder %s51, %s53
      %p57 = scmp.eq.s32.totalorder %s17, 0
      %p58 = por %p56, %p57
      %p59 = scmp.ne.s32.totalorder %s51, %s53
      %p60 = scmp.eq.s32.totalorder %s22, 1
      %p61 = por %p59, %p60
      %p62 = scmp.ne.s32.totalorder %s53, %s54
      %p63 = scmp.eq.s32.totalorder %s22, 0
      %p64 = por %p62, %p63
      %p65 = scmp.ne.s32.totalorder %s53, %s54
      %p66 = scmp.eq.s32.totalorder %s23, 1
      %p67 = por %p65, %p66
      %p69 = scmp.ne.s32.totalorder %s54, %s68
      %p70 = scmp.eq.s32.totalorder %s23, 0
      %p71 = por %p69, %p70
      %s73 = sadd.s32 %s72, 1
      %p76 = scmp.eq.s32.totalorder %s17, 1
      %p77 = scmp.ne.s32.totalorder %s72, %s74
      %p78 = scmp.eq.s32.totalorder %s17, 0
      %p79 = por %p77, %p78
      %p80 = scmp.ne.s32.totalorder %s72, %s74
      %p81 = scmp.eq.s32.totalorder %s22, 1
      %p82 = por %p80, %p81
      %p83 = scmp.ne.s32.totalorder %s74, %s75
      %p84 = scmp.eq.s32.totalorder %s22, 0
      %p85 = por %p83, %p84
      %p86 = scmp.ne.s32.totalorder %s74, %s75
      %p87 = scmp.eq.s32.totalorder %s23, 1
      %p88 = por %p86, %p87
      %p90 = scmp.ne.s32.totalorder %s75, %s89
      %p91 = scmp.eq.s32.totalorder %s23, 0
      %p92 = por %p90, %p91
      %s93 = ssub.s32 %s17, %s24
      %p94 = scmp.eq.s32.totalorder %s93, 0
      %s96 = sadd.s32 %s95, 1
      %s97 = scalar_select %p94, %s95, %s96
      %p100 = pneg %p94
      %p101 = scmp.eq.s32.totalorder %s17, 1
      %p102 = por %p100, %p101
      %p103 = scmp.ne.s32.totalorder %s95, %s98
      %p104 = scmp.eq.s32.totalorder %s17, 0
      %p105 = por %p103, %p104
      %p106 = scmp.ne.s32.totalorder %s95, %s98
      %p107 = scmp.eq.s32.totalorder %s22, 1
      %p108 = por %p106, %p107
      %p109 = scmp.ne.s32.totalorder %s98, %s99
      %p110 = scmp.eq.s32.totalorder %s22, 0
      %p111 = por %p109, %p110
      %p112 = scmp.ne.s32.totalorder %s98, %s99
      %p113 = scmp.eq.s32.totalorder %s23, 1
      %p114 = por %p112, %p113
      %p116 = scmp.ne.s32.totalorder %s99, %s115
      %p117 = scmp.eq.s32.totalorder %s23, 0
      %p118 = por %p116, %p117
      %s119 = ssub.s32 %s17, %s24
      %p120 = scmp.eq.s32.totalorder %s119, 0
      %s122 = sadd.s32 %s121, 1
      %s123 = scalar_select %p120, %s121, %s122
      %p126 = pneg %p120
      %p127 = scmp.eq.s32.totalorder %s17, 1
      %p128 = por %p126, %p127
      %p129 = scmp.ne.s32.totalorder %s121, %s124
      %p130 = scmp.eq.s32.totalorder %s17, 0
      %p131 = por %p129, %p130
      %p132 = scmp.ne.s32.totalorder %s121, %s124
      %p133 = scmp.eq.s32.totalorder %s22, 1
      %p134 = por %p132, %p133
      %p135 = scmp.ne.s32.totalorder %s124, %s125
      %p136 = scmp.eq.s32.totalorder %s22, 0
      %p137 = por %p135, %p136
      %p138 = scmp.ne.s32.totalorder %s124, %s125
      %p139 = scmp.eq.s32.totalorder %s23, 1
      %p140 = por %p138, %p139
      %p142 = scmp.ne.s32.totalorder %s125, %s141
      %p143 = scmp.eq.s32.totalorder %s23, 0
      %p144 = por %p142, %p143
      %p145 = scmp.le.s32.totalorder 1, %s17
      %p146 = scmp.lt.s32.totalorder %s17, 3
      %p147 = pnand %p145, %p146
      %p148 = pneg %p147
      // Predicated region
      $region9: #{tpu_custom_call.1} parent=5 // pred_check
        _
      $region10: #{tpu_custom_call.1} parent=5 // pred_check_branch
        %150 = sbr.rel (%p147) target = $region12
      $region11: #{tpu_custom_call.1} parent=5 // pred_region
        %s151 = ssub.s32 %s17, 1
        // Predicated region
        $region13: #{tpu_custom_call.1} parent=11 // pred_check
          %p152 = pneg %p64
        $region14: #{tpu_custom_call.1} parent=11 // pred_check_branch
          %154 = sbr.rel (%p152) target = $region16
        $region15: #{tpu_custom_call.1} parent=11 // pred_region
          _
        $region16: #{tpu_custom_call.1} parent=11 // pred_fallthru
          _
        // Predicated region
        $region17: #{tpu_custom_call.1} parent=11 // pred_check
          %p155 = pneg %p85
        $region18: #{tpu_custom_call.1} parent=11 // pred_check_branch
          %157 = sbr.rel (%p155) target = $region20
        $region19: #{tpu_custom_call.1} parent=11 // pred_region
          _
        $region20: #{tpu_custom_call.1} parent=11 // pred_fallthru
          _
      $region12: #{tpu_custom_call.1} parent=5 // pred_fallthru
        _
      %p158 = scmp.lt.s32.totalorder %s17, 2
      // Predicated region
      $region21: #{tpu_custom_call.1} parent=5 // pred_check
        %p159 = pneg %p158
      $region22: #{tpu_custom_call.1} parent=5 // pred_check_branch
        %161 = sbr.rel (%p159) target = $region24
      $region23: #{tpu_custom_call.1} parent=5 // pred_region
        // Predicated region
        $region25: #{tpu_custom_call.1} parent=23 // pred_check
          %p162 = pneg %p37
        $region26: #{tpu_custom_call.1} parent=23 // pred_check_branch
          %164 = sbr.rel (%p162) target = $region28
        $region27: #{tpu_custom_call.1} parent=23 // pred_region
          %p165 = scmp.lt.s32.totalorder %s17, 1
          %s166 = scalar_select %p165, %s17, 1
          %s167 = smul.addr %s166, 12
          %s168 = smul.addr %s167, 4
          %s169 = scalar_lea.vmem %s0, %s168
        $region28: #{tpu_custom_call.1} parent=23 // pred_fallthru
          _
      $region24: #{tpu_custom_call.1} parent=5 // pred_fallthru
        _
      %p170 = scmp.le.s32.totalorder 1, %s17
      %p171 = scmp.lt.s32.totalorder %s17, 3
      %p172 = pnand %p170, %p171
      %p173 = pneg %p172
      // Predicated region
      $region29: #{tpu_custom_call.1} parent=5 // pred_check
        _
      $region30: #{tpu_custom_call.1} parent=5 // pred_check_branch
        %175 = sbr.rel (%p172) target = $region32
      $region31: #{tpu_custom_call.1} parent=5 // pred_region
        %s176 = ssub.s32 %s17, 1
        %p177 = scmp.lt.s32.totalorder %s22, 1
        %s178 = scalar_select %p177, %s22, 1
        %s179 = smul.addr %s178, 12
        %s180 = smul.addr %s179, 4
        %s181 = scalar_lea.vmem %s0, %s180
        %p182 = pneg %p43
        %p183 = pneg %p40
        %p184 = pneg %p64
        %p185 = pneg %p61
        %p186 = pneg %p85
        %p187 = pneg %p82
        %p188 = pneg %p111
        %p189 = pneg %p108
        %s190 = sand.u32 %s98, 1
        %s191 = scalar_lea.sflag [#allocation3], %s190
        %s192 = sand.u32 %s98, 1
        %s193 = smul.addr %s192, 36
        %s194 = scalar_lea.vmem [#allocation2], %s193
        %p195 = pneg %p137
        %p196 = pneg %p134
        %s197 = sand.u32 %s124, 1
        %s198 = scalar_lea.sflag [#allocation5], %s197
        %s199 = sand.u32 %s124, 1
        %s200 = smul.addr %s199, 2
        %s201 = scalar_lea.vmem [#allocation4], %s200
        %p202 = scmp.lt.s32.totalorder %s22, 1
        %s203 = scalar_select %p202, %s22, 1
        %s204 = smul.addr %s203, 12
        %s205 = smul.addr %s204, 4
        %s206 = scalar_lea.vmem %s0, %s205
        %v208 = vld [vmem:[%s206] sm:$0xf]
        %v209 = vld [vmem:[%s206 + $0x4] sm:$0xf]
        %v210 = vld [vmem:[%s206 + $0x8] sm:$0xf]
        %v211 = vld [vmem:[%s206 + $0xc] sm:$0xf]
        %v212 = vld [vmem:[%s206 + $0x10] sm:$0xf]
        %v213 = vld [vmem:[%s206 + $0x14] sm:$0xf]
        %v214 = vld [vmem:[%s206 + $0x18] sm:$0xf]
        %v215 = vld [vmem:[%s206 + $0x1c] sm:$0xf]
        %v216 = vld [vmem:[%s206 + $0x20] sm:$0xf]
        %v217 = vld [vmem:[%s1] sm:$0xf]
        %v218 = vld [vmem:[%s1 + $0x4] sm:$0xf]
        %v219 = vld [vmem:[%s206 + $0x24] sm:$0x1]
        %s220 = scalar_lea.vmem %s1, 8
        %v221 = vld [vmem:[%s220] sm:$0xf]
        %v222 = vld [vmem:[%s220 + $0x4] sm:$0xf]
        %v233 = vunpack.c.l.b16 %v208
        %v234 = vunpack.c.l.b16 %v209
        %v235 = vunpack.c.l.b16 %v210
        %v236 = vunpack.c.l.b16 %v211
        %v237 = vunpack.c.l.b16 %v212
        %v238 = vunpack.c.l.b16 %v213
        %v239 = vunpack.c.l.b16 %v214
        %v240 = vunpack.c.l.b16 %v215
        %v241 = vunpack.c.l.b16 %v216
        %v242 = vunpack.c.l.b16 %v219
        %v243 = vpack.c.b16 %v234, %v233
        %v244 = vpack.c.b16 %v236, %v235
        %v245 = vpack.c.b16 %v238, %v237
        %v246 = vpack.c.b16 %v240, %v239
        %v247 = vpack.c.b16 %v242, %v241
        %vm248 = vsmask.f32 7424
        %v250 = vshrl.u32 %v243, 16
        %v252 = vshll.u32 %v243, 16
        %v254 = vrot.slane %v252, 1
        %v255 = vor.u32 %v250, %v254
        %v257 = vshll.u32 %v244, 16
        %v259 = vrot.slane %v257, 1
        %v260 = vsel %vm248, %v255, %v259
        %v261 = vshrl.u32 %v244, 16
        %v263 = vor.u32 %v261, %v259
        %v265 = vshll.u32 %v245, 16
        %v267 = vrot.slane %v265, 1
        %v268 = vsel %vm248, %v263, %v267
        %v269 = vshrl.u32 %v245, 16
        %v271 = vor.u32 %v269, %v267
        %v273 = vshll.u32 %v246, 16
        %v275 = vrot.slane %v273, 1
        %v276 = vsel %vm248, %v271, %v275
        %v277 = vshrl.u32 %v246, 16
        %v279 = vor.u32 %v277, %v275
        %v281 = vshll.u32 %v247, 16
        %v283 = vrot.slane %v281, 1
        %v284 = vsel %vm248, %v279, %v283
        %v285 = vshrl.u32 %v247, 16
        %v287 = vor.u32 %v285, %v283
        %v290 = vunpack.c.l.b16 %v221
        %v291 = vunpack.c.l.b16 %v222
        %v292 = vpack.c.b16 %v291, %v290
        %vm294 = vcmask 130048
        %v296 = vsel %vm294, %v260, 0
        %v299 = vsel %vm294, %v268, 0
        %v302 = vsel %vm294, %v276, 0
        %v305 = vsel %vm294, %v284, 0
        %v308 = vsel %vm294, %v287, 0
        %310 = vmatprep.subr.bf16.mxu0 0
        %311 = vmatpush1.bf16.msra.mxu0 %v292
        %312 = vmatprep.subr.bf16.mxu0 0
        %313 = vmatpush1.bf16.msra.mxu0 0
        %314 = vmatprep.subr.bf16.mxu0 0
        %315 = vmatpush1.bf16.msra.mxu0 0
        %316 = vmatprep.subr.bf16.mxu0 0
        %317 = vmatpush1.bf16.msra.mxu0 0
        %318 = vmatprep.subr.bf16.mxu0 0
        %319 = vmatpush1.bf16.msra.mxu0 0
        %320 = vmatprep.subr.bf16.mxu0 0
        %321 = vmatpush1.bf16.msra.mxu0 0
        %322 = vmatprep.subr.bf16.mxu0 0
        %323 = vmatpush1.bf16.msra.mxu0 0
        %324 = vmatprep.subr.bf16.mxu0 0
        %325 = vmatpush1.bf16.msra.mxu0 0
        %326 = vmatprep.subr.bf16.mxu0 0
        %327 = vmatpush1.bf16.msra.mxu0 0
        %328 = vmatprep.subr.bf16.mxu0 0
        %329 = vmatpush1.bf16.msra.mxu0 0
        %330 = vmatprep.subr.bf16.mxu0 0
        %331 = vmatpush1.bf16.msra.mxu0 0
        %332 = vmatprep.subr.bf16.mxu0 0
        %333 = vmatpush1.bf16.msra.mxu0 0
        %334 = vmatprep.subr.bf16.mxu0 0
        %335 = vmatpush1.bf16.msra.mxu0 0
        %336 = vmatprep.subr.bf16.mxu0 0
        %337 = vmatpush1.bf16.msra.mxu0 0
        %338 = vmatprep.subr.bf16.mxu0 0
        %339 = vmatpush1.bf16.msra.mxu0 0
        %340 = vmatprep.subr.bf16.mxu0 0
        %341 = vmatpush1.bf16.msra.mxu0 0
        %342 = vmatprep.mubr.bf16.mxu0 0
        %343 = vmatmul.mubr.bf16.gmra.mrb[0].mxu0 %v296
        %v344 = vpop.f32.mrb[0].mxu0
        %v345 = vadd.f32 0.0, %v344
        %v346 = vpop.f32.mrb[0].mxu0
        %v347 = vpop.f32.mrb[0].mxu0
        %v348 = vadd.f32 0.0, %v347
        %v349 = vpop.f32.mrb[0].mxu0
        %350 = vmatprep.mubr.bf16.mxu0 0
        %351 = vmatmul.mubr.bf16.gmra.mrb[0].mxu0 %v299
        %v352 = vpop.f32.mrb[0].mxu0
        %v353 = vadd.f32 0.0, %v352
        %v354 = vpop.f32.mrb[0].mxu0
        %v355 = vpop.f32.mrb[0].mxu0
        %v356 = vadd.f32 0.0, %v355
        %v357 = vpop.f32.mrb[0].mxu0
        %358 = vmatprep.mubr.bf16.mxu0 0
        %359 = vmatmul.mubr.bf16.gmra.mrb[0].mxu0 %v302
        %v360 = vpop.f32.mrb[0].mxu0
        %v361 = vadd.f32 0.0, %v360
        %v362 = vpop.f32.mrb[0].mxu0
        %v363 = vpop.f32.mrb[0].mxu0
        %v364 = vadd.f32 0.0, %v363
        %v365 = vpop.f32.mrb[0].mxu0
        %366 = vmatprep.mubr.bf16.mxu0 0
        %367 = vmatmul.mubr.bf16.gmra.mrb[0].mxu0 %v305
        %v368 = vpop.f32.mrb[0].mxu0
        %v369 = vadd.f32 0.0, %v368
        %v370 = vpop.f32.mrb[0].mxu0
        %v371 = vpop.f32.mrb[0].mxu0
        %v372 = vadd.f32 0.0, %v371
        %v373 = vpop.f32.mrb[0].mxu0
        %374 = vmatprep.mubr.bf16.mxu0 0
        %375 = vmatmul.mubr.bf16.gmra.mrb[0].mxu0 %v308
        %v376 = vpop.f32.mrb[0].mxu0
        %v377 = vadd.f32 0.0, %v376
        %v378 = vpop.f32.mrb[0].mxu0
        %v379 = vpop.f32.mrb[0].mxu0
        %v380 = vpop.f32.mrb[0].mxu0
        %381 = vdwg.mxu0
        %v382 = vpack.c.b16 %v241, %v241
        %v385 = vunpack.c.l.b16 %v217
        %v386 = vunpack.c.l.b16 %v218
        %v387 = vpack.c.b16 %v386, %v385
        %v389 = vsel %vm294, %v243, 0
        %v391 = vsel %vm294, %v244, 0
        %v393 = vsel %vm294, %v245, 0
        %v395 = vsel %vm294, %v246, 0
        %v398 = vsel %vm294, %v382, 0
        %400 = vmatprep.subr.bf16.mxu0 0
        %401 = vmatpush1.bf16.msra.mxu0 %v387
        %402 = vmatprep.subr.bf16.mxu0 0
        %403 = vmatpush1.bf16.msra.mxu0 0
        %404 = vmatprep.subr.bf16.mxu0 0
        %405 = vmatpush1.bf16.msra.mxu0 0
        %406 = vmatprep.subr.bf16.mxu0 0
        %407 = vmatpush1.bf16.msra.mxu0 0
        %408 = vmatprep.subr.bf16.mxu0 0
        %409 = vmatpush1.bf16.msra.mxu0 0
        %410 = vmatprep.subr.bf16.mxu0 0
        %411 = vmatpush1.bf16.msra.mxu0 0
        %412 = vmatprep.subr.bf16.mxu0 0
        %413 = vmatpush1.bf16.msra.mxu0 0
        %414 = vmatprep.subr.bf16.mxu0 0
        %415 = vmatpush1.bf16.msra.mxu0 0
        %416 = vmatprep.subr.bf16.mxu0 0
        %417 = vmatpush1.bf16.msra.mxu0 0
        %418 = vmatprep.subr.bf16.mxu0 0
        %419 = vmatpush1.bf16.msra.mxu0 0
        %420 = vmatprep.subr.bf16.mxu0 0
        %421 = vmatpush1.bf16.msra.mxu0 0
        %422 = vmatprep.subr.bf16.mxu0 0
        %423 = vmatpush1.bf16.msra.mxu0 0
        %424 = vmatprep.subr.bf16.mxu0 0
        %425 = vmatpush1.bf16.msra.mxu0 0
        %426 = vmatprep.subr.bf16.mxu0 0
        %427 = vmatpush1.bf16.msra.mxu0 0
        %428 = vmatprep.subr.bf16.mxu0 0
        %429 = vmatpush1.bf16.msra.mxu0 0
        %430 = vmatprep.subr.bf16.mxu0 0
        %431 = vmatpush1.bf16.msra.mxu0 0
        %432 = vmatprep.mubr.bf16.mxu0 0
        %433 = vmatmul.mubr.bf16.gmra.mrb[0].mxu0 %v389
        %v434 = vpop.f32.mrb[0].mxu0
        %v435 = vadd.f32 %v345, %v434
        %v436 = vpop.f32.mrb[0].mxu0
        %v437 = vpop.f32.mrb[0].mxu0
        %v438 = vadd.f32 %v348, %v437
        %v439 = vpop.f32.mrb[0].mxu0
        %440 = vmatprep.mubr.bf16.mxu0 0
        %441 = vmatmul.mubr.bf16.gmra.mrb[0].mxu0 %v391
        %v442 = vpop.f32.mrb[0].mxu0
        %v443 = vadd.f32 %v353, %v442
        %v444 = vpop.f32.mrb[0].mxu0
        %v445 = vpop.f32.mrb[0].mxu0
        %v446 = vadd.f32 %v356, %v445
        %v447 = vpop.f32.mrb[0].mxu0
        %448 = vmatprep.mubr.bf16.mxu0 0
        %449 = vmatmul.mubr.bf16.gmra.mrb[0].mxu0 %v393
        %v450 = vpop.f32.mrb[0].mxu0
        %v451 = vadd.f32 %v361, %v450
        %v452 = vpop.f32.mrb[0].mxu0
        %v453 = vpop.f32.mrb[0].mxu0
        %v454 = vadd.f32 %v364, %v453
        %v455 = vpop.f32.mrb[0].mxu0
        %456 = vmatprep.mubr.bf16.mxu0 0
        %457 = vmatmul.mubr.bf16.gmra.mrb[0].mxu0 %v395
        %v458 = vpop.f32.mrb[0].mxu0
        %v459 = vadd.f32 %v369, %v458
        %v460 = vpop.f32.mrb[0].mxu0
        %v461 = vpop.f32.mrb[0].mxu0
        %v462 = vadd.f32 %v372, %v461
        %v463 = vpop.f32.mrb[0].mxu0
        %464 = vmatprep.mubr.bf16.mxu0 0
        %465 = vmatmul.mubr.bf16.gmra.mrb[0].mxu0 %v398
        %v466 = vpop.f32.mrb[0].mxu0
        %v467 = vadd.f32 %v377, %v466
        %v468 = vpop.f32.mrb[0].mxu0
        %v469 = vpop.f32.mrb[0].mxu0
        %v470 = vpop.f32.mrb[0].mxu0
        %471 = vdwg.mxu0
        %v472 = vld [vmem:[%s206 + $0x4] sm:$0xf]
        %v473 = vld [vmem:[%s206 + $0x8] sm:$0xf]
        %v474 = vld [vmem:[%s206 + $0xc] sm:$0xf]
        %v475 = vld [vmem:[%s206 + $0x10] sm:$0xf]
        %v476 = vld [vmem:[%s206 + $0x14] sm:$0xf]
        %v477 = vld [vmem:[%s206 + $0x18] sm:$0xf]
        %v478 = vld [vmem:[%s206 + $0x1c] sm:$0xf]
        %v479 = vld [vmem:[%s206 + $0x20] sm:$0xf]
        %v480 = vld [vmem:[%s206 + $0x24] sm:$0xf]
        %v481 = vld [vmem:[%s206 + $0x28] sm:$0x1]
        %s482 = scalar_lea.vmem %s1, 16
        %v483 = vld [vmem:[%s482] sm:$0xf]
        %v484 = vld [vmem:[%s482 + $0x4] sm:$0xf]
        %v495 = vunpack.c.l.b16 %v472
        %v496 = vunpack.c.l.b16 %v473
        %v497 = vunpack.c.l.b16 %v474
        %v498 = vunpack.c.l.b16 %v475
        %v499 = vunpack.c.l.b16 %v476
        %v500 = vunpack.c.l.b16 %v477
        %v501 = vunpack.c.l.b16 %v478
        %v502 = vunpack.c.l.b16 %v479
        %v503 = vunpack.c.l.b16 %v480
        %v504 = vunpack.c.l.b16 %v481
        %v505 = vpack.c.b16 %v496, %v495
        %v506 = vpack.c.b16 %v498, %v497
        %v507 = vpack.c.b16 %v500, %v499
        %v508 = vpack.c.b16 %v502, %v501
        %v509 = vpack.c.b16 %v504, %v503
        %v511 = vshrl.u32 %v505, 16
        %v513 = vshll.u32 %v505, 16
        %v515 = vrot.slane %v513, 1
        %v516 = vor.u32 %v511, %v515
        %v518 = vshll.u32 %v506, 16
        %v520 = vrot.slane %v518, 1
        %v521 = vsel %vm248, %v516, %v520
        %v522 = vshrl.u32 %v506, 16
        %v524 = vor.u32 %v522, %v520
        %v526 = vshll.u32 %v507, 16
        %v528 = vrot.slane %v526, 1
        %v529 = vsel %vm248, %v524, %v528
        %v530 = vshrl.u32 %v507, 16
        %v532 = vor.u32 %v530, %v528
        %v534 = vshll.u32 %v508, 16
        %v536 = vrot.slane %v534, 1
        %v537 = vsel %vm248, %v532, %v536
        %v538 = vshrl.u32 %v508, 16
        %v540 = vor.u32 %v538, %v536
        %v542 = vshll.u32 %v509, 16
        %v544 = vrot.slane %v542, 1
        %v545 = vsel %vm248, %v540, %v544
        %v546 = vshrl.u32 %v509, 16
        %v548 = vor.u32 %v546, %v544
        %v551 = vunpack.c.l.b16 %v483
        %v552 = vunpack.c.l.b16 %v484
        %v553 = vpack.c.b16 %v552, %v551
        %v556 = vsel %vm294, %v521, 0
        %v559 = vsel %vm294, %v529, 0
        %v562 = vsel %vm294, %v537, 0
        %v565 = vsel %vm294, %v545, 0
        %v568 = vsel %vm294, %v548, 0
        %570 = vmatprep.subr.bf16.mxu0 0
        %571 = vmatpush1.bf16.msra.mxu0 %v553
        %572 = vmatprep.subr.bf16.mxu0 0
        %573 = vmatpush1.bf16.msra.mxu0 0
        %574 = vmatprep.subr.bf16.mxu0 0
        %575 = vmatpush1.bf16.msra.mxu0 0
        %576 = vmatprep.subr.bf16.mxu0 0
        %577 = vmatpush1.bf16.msra.mxu0 0
        %578 = vmatprep.subr.bf16.mxu0 0
        %579 = vmatpush1.bf16.msra.mxu0 0
        %580 = vmatprep.subr.bf16.mxu0 0
        %581 = vmatpush1.bf16.msra.mxu0 0
        %582 = vmatprep.subr.bf16.mxu0 0
        %583 = vmatpush1.bf16.msra.mxu0 0
        %584 = vmatprep.subr.bf16.mxu0 0
        %585 = vmatpush1.bf16.msra.mxu0 0
        %586 = vmatprep.subr.bf16.mxu0 0
        %587 = vmatpush1.bf16.msra.mxu0 0
        %588 = vmatprep.subr.bf16.mxu0 0
        %589 = vmatpush1.bf16.msra.mxu0 0
        %590 = vmatprep.subr.bf16.mxu0 0
        %591 = vmatpush1.bf16.msra.mxu0 0
        %592 = vmatprep.subr.bf16.mxu0 0
        %593 = vmatpush1.bf16.msra.mxu0 0
        %594 = vmatprep.subr.bf16.mxu0 0
        %595 = vmatpush1.bf16.msra.mxu0 0
        %596 = vmatprep.subr.bf16.mxu0 0
        %597 = vmatpush1.bf16.msra.mxu0 0
        %598 = vmatprep.subr.bf16.mxu0 0
        %599 = vmatpush1.bf16.msra.mxu0 0
        %600 = vmatprep.subr.bf16.mxu0 0
        %601 = vmatpush1.bf16.msra.mxu0 0
        %602 = vmatprep.mubr.bf16.mxu0 0
        %603 = vmatmul.mubr.bf16.gmra.mrb[0].mxu0 %v556
        %v604 = vpop.f32.mrb[0].mxu0
        %v605 = vadd.f32 0.0, %v604
        %v606 = vpop.f32.mrb[0].mxu0
        %v607 = vpop.f32.mrb[0].mxu0
        %v608 = vadd.f32 0.0, %v607
        %v609 = vpop.f32.mrb[0].mxu0
        %610 = vmatprep.mubr.bf16.mxu0 0
        %611 = vmatmul.mubr.bf16.gmra.mrb[0].mxu0 %v559
        %v612 = vpop.f32.mrb[0].mxu0
        %v613 = vadd.f32 0.0, %v612
        %v614 = vpop.f32.mrb[0].mxu0
        %v615 = vpop.f32.mrb[0].mxu0
        %v616 = vadd.f32 0.0, %v615
        %v617 = vpop.f32.mrb[0].mxu0
        %618 = vmatprep.mubr.bf16.mxu0 0
        %619 = vmatmul.mubr.bf16.gmra.mrb[0].mxu0 %v562
        %v620 = vpop.f32.mrb[0].mxu0
        %v621 = vadd.f32 0.0, %v620
        %v622 = vpop.f32.mrb[0].mxu0
        %v623 = vpop.f32.mrb[0].mxu0
        %v624 = vadd.f32 0.0, %v623
        %v625 = vpop.f32.mrb[0].mxu0
        %626 = vmatprep.mubr.bf16.mxu0 0
        %627 = vmatmul.mubr.bf16.gmra.mrb[0].mxu0 %v565
        %v628 = vpop.f32.mrb[0].mxu0
        %v629 = vadd.f32 0.0, %v628
        %v630 = vpop.f32.mrb[0].mxu0
        %v631 = vpop.f32.mrb[0].mxu0
        %v632 = vadd.f32 0.0, %v631
        %v633 = vpop.f32.mrb[0].mxu0
        %634 = vmatprep.mubr.bf16.mxu0 0
        %635 = vmatmul.mubr.bf16.gmra.mrb[0].mxu0 %v568
        %v636 = vpop.f32.mrb[0].mxu0
        %v637 = vadd.f32 0.0, %v636
        %v638 = vpop.f32.mrb[0].mxu0
        %v639 = vpop.f32.mrb[0].mxu0
        %v640 = vpop.f32.mrb[0].mxu0
        %641 = vdwg.mxu0
        %v642 = vadd.f32 %v435, %v605
        %v643 = vadd.f32 %v438, %v608
        %v644 = vadd.f32 %v443, %v613
        %v645 = vadd.f32 %v446, %v616
        %v646 = vadd.f32 %v451, %v621
        %v647 = vadd.f32 %v454, %v624
        %v648 = vadd.f32 %v459, %v629
        %v649 = vadd.f32 %v462, %v632
        %v650 = vadd.f32 %v467, %v637
        %v651 = vld [vmem:[%s206 + $0x4] sm:$0xe]
        %s652 = scalar_lea.vmem %s1, 24
        %v653 = vld [vmem:[%s652] sm:$0xf]
        %v654 = vld [vmem:[%s652 + $0x4] sm:$0xf]
        %v656 = vunpack.c.l.b16 %v651
        %v657 = vpack.c.b16 %v496, %v656
        %vm658 = vcmask 1046528
        %v659 = vrot.slane %v657, 1
        %v660 = vrot.slane %v506, 1
        %v661 = vsel %vm658, %v659, %v660
        %v662 = vrot.slane %v507, 1
        %v663 = vsel %vm658, %v660, %v662
        %v664 = vrot.slane %v508, 1
        %v665 = vsel %vm658, %v662, %v664
        %v666 = vrot.slane %v509, 1
        %v667 = vsel %vm658, %v664, %v666
        %v670 = vunpack.c.l.b16 %v653
        %v671 = vunpack.c.l.b16 %v654
        %v672 = vpack.c.b16 %v671, %v670
        %v675 = vsel %vm294, %v661, 0
        %v678 = vsel %vm294, %v663, 0
        %v681 = vsel %vm294, %v665, 0
        %v684 = vsel %vm294, %v667, 0
        %v687 = vsel %vm294, %v666, 0
        %689 = vmatprep.subr.bf16.mxu0 0
        %690 = vmatpush1.bf16.msra.mxu0 %v672
        %691 = vmatprep.subr.bf16.mxu0 0
        %692 = vmatpush1.bf16.msra.mxu0 0
        %693 = vmatprep.subr.bf16.mxu0 0
        %694 = vmatpush1.bf16.msra.mxu0 0
        %695 = vmatprep.subr.bf16.mxu0 0
        %696 = vmatpush1.bf16.msra.mxu0 0
        %697 = vmatprep.subr.bf16.mxu0 0
        %698 = vmatpush1.bf16.msra.mxu0 0
        %699 = vmatprep.subr.bf16.mxu0 0
        %700 = vmatpush1.bf16.msra.mxu0 0
        %701 = vmatprep.subr.bf16.mxu0 0
        %702 = vmatpush1.bf16.msra.mxu0 0
        %703 = vmatprep.subr.bf16.mxu0 0
        %704 = vmatpush1.bf16.msra.mxu0 0
        %705 = vmatprep.subr.bf16.mxu0 0
        %706 = vmatpush1.bf16.msra.mxu0 0
        %707 = vmatprep.subr.bf16.mxu0 0
        %708 = vmatpush1.bf16.msra.mxu0 0
        %709 = vmatprep.subr.bf16.mxu0 0
        %710 = vmatpush1.bf16.msra.mxu0 0
        %711 = vmatprep.subr.bf16.mxu0 0
        %712 = vmatpush1.bf16.msra.mxu0 0
        %713 = vmatprep.subr.bf16.mxu0 0
        %714 = vmatpush1.bf16.msra.mxu0 0
        %715 = vmatprep.subr.bf16.mxu0 0
        %716 = vmatpush1.bf16.msra.mxu0 0
        %717 = vmatprep.subr.bf16.mxu0 0
        %718 = vmatpush1.bf16.msra.mxu0 0
        %719 = vmatprep.subr.bf16.mxu0 0
        %720 = vmatpush1.bf16.msra.mxu0 0
        %721 = vmatprep.mubr.bf16.mxu0 0
        %722 = vmatmul.mubr.bf16.gmra.mrb[0].mxu0 %v675
        %v723 = vpop.f32.mrb[0].mxu0
        %v724 = vadd.f32 0.0, %v723
        %v725 = vpop.f32.mrb[0].mxu0
        %v726 = vpop.f32.mrb[0].mxu0
        %v727 = vadd.f32 0.0, %v726
        %v728 = vpop.f32.mrb[0].mxu0
        %729 = vmatprep.mubr.bf16.mxu0 0
        %730 = vmatmul.mubr.bf16.gmra.mrb[0].mxu0 %v678
        %v731 = vpop.f32.mrb[0].mxu0
        %v732 = vadd.f32 0.0, %v731
        %v733 = vpop.f32.mrb[0].mxu0
        %v734 = vpop.f32.mrb[0].mxu0
        %v735 = vadd.f32 0.0, %v734
        %v736 = vpop.f32.mrb[0].mxu0
        %737 = vmatprep.mubr.bf16.mxu0 0
        %738 = vmatmul.mubr.bf16.gmra.mrb[0].mxu0 %v681
        %v739 = vpop.f32.mrb[0].mxu0
        %v740 = vadd.f32 0.0, %v739
        %v741 = vpop.f32.mrb[0].mxu0
        %v742 = vpop.f32.mrb[0].mxu0
        %v743 = vadd.f32 0.0, %v742
        %v744 = vpop.f32.mrb[0].mxu0
        %745 = vmatprep.mubr.bf16.mxu0 0
        %746 = vmatmul.mubr.bf16.gmra.mrb[0].mxu0 %v684
        %v747 = vpop.f32.mrb[0].mxu0
        %v748 = vadd.f32 0.0, %v747
        %v749 = vpop.f32.mrb[0].mxu0
        %v750 = vpop.f32.mrb[0].mxu0
        %v751 = vadd.f32 0.0, %v750
        %v752 = vpop.f32.mrb[0].mxu0
        %753 = vmatprep.mubr.bf16.mxu0 0
        %754 = vmatmul.mubr.bf16.gmra.mrb[0].mxu0 %v687
        %v755 = vpop.f32.mrb[0].mxu0
        %v756 = vadd.f32 0.0, %v755
        %v757 = vpop.f32.mrb[0].mxu0
        %v758 = vpop.f32.mrb[0].mxu0
        %v759 = vpop.f32.mrb[0].mxu0
        %760 = vdwg.mxu0
        %v761 = vadd.f32 %v642, %v724
        %v762 = vadd.f32 %v643, %v727
        %v763 = vadd.f32 %v644, %v732
        %v764 = vadd.f32 %v645, %v735
        %v765 = vadd.f32 %v646, %v740
        %v766 = vadd.f32 %v647, %v743
        %v767 = vadd.f32 %v648, %v748
        %v768 = vadd.f32 %v649, %v751
        %v769 = vadd.f32 %v650, %v756
        %v770 = vld [vmem:[%s2] sm:$0xff]
        %v771 = vld [vmem:[%s2 + $0x8] sm:$0xff]
        %v772 = vld [vmem:[%s2 + $0x10] sm:$0xff]
        %v773 = vld [vmem:[%s2 + $0x18] sm:$0xff]
        %v774 = vld [vmem:[%s2 + $0x20] sm:$0xff]
        %v775 = vld [vmem:[%s2 + $0x28] sm:$0xff]
        %v776 = vld [vmem:[%s2 + $0x30] sm:$0xff]
        %v777 = vld [vmem:[%s2 + $0x38] sm:$0xff]
        %v778 = vld [vmem:[%s2 + $0x40] sm:$0xff]
        %780 = vset.pattern.permute.xlu0 0
        %781 = vperm.xlu0 %780, %v770
        %v782 = vpop.permute.xlu0 %781
        %785 = vset.pattern.permute.xlu0 0
        %786 = vperm.xlu0 %785, %v771
        %v787 = vpop.permute.xlu0 %786
        %790 = vset.pattern.permute.xlu0 0
        %791 = vperm.xlu0 %790, %v772
        %v792 = vpop.permute.xlu0 %791
        %795 = vset.pattern.permute.xlu0 0
        %796 = vperm.xlu0 %795, %v773
        %v797 = vpop.permute.xlu0 %796
        %800 = vset.pattern.permute.xlu0 0
        %801 = vperm.xlu0 %800, %v774
        %v802 = vpop.permute.xlu0 %801
        %805 = vset.pattern.permute.xlu0 0
        %806 = vperm.xlu0 %805, %v775
        %v807 = vpop.permute.xlu0 %806
        %810 = vset.pattern.permute.xlu0 0
        %811 = vperm.xlu0 %810, %v776
        %v812 = vpop.permute.xlu0 %811
        %815 = vset.pattern.permute.xlu0 0
        %816 = vperm.xlu0 %815, %v777
        %v817 = vpop.permute.xlu0 %816
        %820 = vset.pattern.permute.xlu0 0
        %821 = vperm.xlu0 %820, %v778
        %v822 = vpop.permute.xlu0 %821
        %v824 = vmul.f32 %v761, %v782
        %v825 = vmul.f32 %v762, %v787
        %v826 = vmul.f32 %v763, %v792
        %v827 = vmul.f32 %v764, %v797
        %v828 = vmul.f32 %v765, %v802
        %v829 = vmul.f32 %v766, %v807
        %v830 = vmul.f32 %v767, %v812
        %v831 = vmul.f32 %v768, %v817
        %v832 = vmul.f32 %v769, %v822
        %v833 = vadd.f32 %v824, %v825
        %v834 = vadd.f32 %v833, %v826
        %v835 = vadd.f32 %v834, %v827
        %v836 = vadd.f32 %v835, %v828
        %v837 = vadd.f32 %v836, %v829
        %v838 = vadd.f32 %v837, %v830
        %v839 = vadd.f32 %v838, %v831
        %v840 = vadd.f32 %v839, %v832
        %v841 = vrot.slane %v840, 4
        %v842 = vadd.f32 %v840, %v841
        %v843 = vrot.slane %v842, 2
        %v844 = vadd.f32 %v842, %v843
        %v845 = vrot.slane %v844, 1
        %v846 = vadd.f32 %v844, %v845
        %847 = vst [vmem:[%s201] sm:$0x1] %v846
        %v848 = vmul.f32 %v824, %v761
        %v849 = vmul.f32 %v825, %v762
        %v850 = vmul.f32 %v826, %v763
        %v851 = vmul.f32 %v827, %v764
        %v852 = vmul.f32 %v828, %v765
        %v853 = vmul.f32 %v829, %v766
        %v854 = vmul.f32 %v830, %v767
        %v855 = vmul.f32 %v831, %v768
        %v856 = vmul.f32 %v832, %v769
        %v857 = vadd.f32 %v848, %v849
        %v858 = vadd.f32 %v857, %v850
        %v859 = vadd.f32 %v858, %v851
        %v860 = vadd.f32 %v859, %v852
        %v861 = vadd.f32 %v860, %v853
        %v862 = vadd.f32 %v861, %v854
        %v863 = vadd.f32 %v862, %v855
        %v864 = vadd.f32 %v863, %v856
        %v865 = vrot.slane %v864, 4
        %v866 = vadd.f32 %v864, %v865
        %v867 = vrot.slane %v866, 2
        %v868 = vadd.f32 %v866, %v867
        %v869 = vrot.slane %v868, 1
        %v870 = vadd.f32 %v868, %v869
        %871 = vst [vmem:[%s201 + $0x1] sm:$0x1] %v870
        %v872 = vpack.c.bf16 %v762, %v761
        %v873 = vpack.c.bf16 %v764, %v763
        %v874 = vpack.c.bf16 %v766, %v765
        %v875 = vpack.c.bf16 %v768, %v767
        %v876 = vpack.c.bf16 %v769, %v769
        %v882 = vunpack.c.l.b16 %v872
        %v883 = vunpack.c.h.b16 %v872
        %v884 = vunpack.c.l.b16 %v873
        %v885 = vunpack.c.h.b16 %v873
        %v886 = vunpack.c.l.b16 %v874
        %v887 = vunpack.c.h.b16 %v874
        %v888 = vunpack.c.l.b16 %v875
        %v889 = vunpack.c.h.b16 %v875
        %v890 = vunpack.c.l.b16 %v876
        %v891 = vpack.c.b16 %v882, %v882
        %v892 = vpack.c.b16 %v883, %v883
        %v893 = vpack.c.b16 %v884, %v884
        %v894 = vpack.c.b16 %v885, %v885
        %v895 = vpack.c.b16 %v886, %v886
        %v896 = vpack.c.b16 %v887, %v887
        %v897 = vpack.c.b16 %v888, %v888
        %v898 = vpack.c.b16 %v889, %v889
        %v899 = vpack.c.b16 %v890, %v890
        %909 = vst [vmem:[%s194] sm:$0xf] %v891
        %910 = vst [vmem:[%s194 + $0x4] sm:$0xf] %v892
        %911 = vst [vmem:[%s194 + $0x8] sm:$0xf] %v893
        %912 = vst [vmem:[%s194 + $0xc] sm:$0xf] %v894
        %913 = vst [vmem:[%s194 + $0x10] sm:$0xf] %v895
        %914 = vst [vmem:[%s194 + $0x14] sm:$0xf] %v896
        %915 = vst [vmem:[%s194 + $0x18] sm:$0xf] %v897
        %916 = vst [vmem:[%s194 + $0x1c] sm:$0xf] %v898
        %917 = vst [vmem:[%s194 + $0x20] sm:$0xf] %v899
        %s918 = sand.u32 %s98, 1
        %s919 = scalar_lea.sflag [#allocation3], %s918
        %s920 = sand.u32 %s98, 1
        %s921 = smul.addr %s920, 36
        %s922 = scalar_lea.vmem [#allocation2], %s921
        %s923 = sand.u32 %s124, 1
        %s924 = scalar_lea.sflag [#allocation5], %s923
        %s925 = sand.u32 %s124, 1
        %s926 = smul.addr %s925, 2
        %s927 = scalar_lea.vmem [#allocation4], %s926
        // Predicated region
        $region33: #{tpu_custom_call.1} parent=31 // pred_check
          %p928 = pneg %p108
        $region34: #{tpu_custom_call.1} parent=31 // pred_check_branch
          %930 = sbr.rel (%p928) target = $region36
        $region35: #{tpu_custom_call.1} parent=31 // pred_region
          %s932 = ssub.s32 576, 576
          %933 = vsyncadd %s919, %s932
          %s934 = smul.addr %s22, 9
          %s935 = smul.addr %s934, 64
          %s936 = scalar_lea.hbm %s3, %s935
          %s937 = sshll.u32 %s922, 4
          %s938 = int_to_ptr.vmem [resolvable:$true] %s937
          %943 = dma.vmem_to_hbm [thread:$0]  %s938, 576, %s936, %s919, 64, 64, 4
        $region36: #{tpu_custom_call.1} parent=31 // pred_fallthru
          _
        // Predicated region
        $region37: #{tpu_custom_call.1} parent=31 // pred_check
          %p944 = pneg %p134
        $region38: #{tpu_custom_call.1} parent=31 // pred_check_branch
          %946 = sbr.rel (%p944) target = $region40
        $region39: #{tpu_custom_call.1} parent=31 // pred_region
          %s948 = ssub.s32 32, 32
          %949 = vsyncadd %s924, %s948
          %s950 = smul.addr %s22, 32
          %s951 = scalar_lea.hbm %s4, %s950
          %s953 = sshll.u32 %s927, 4
          %s954 = int_to_ptr.vmem [resolvable:$true] %s953
          %956 = dma.vmem_to_hbm [thread:$0]  %s954, 32, %s951, %s924
        $region40: #{tpu_custom_call.1} parent=31 // pred_fallthru
          _
      $region32: #{tpu_custom_call.1} parent=5 // pred_fallthru
        _
      %p957 = scmp.le.s32.totalorder 2, %s17
      // Predicated region
      $region41: #{tpu_custom_call.1} parent=5 // pred_check
        %p958 = pneg %p957
      $region42: #{tpu_custom_call.1} parent=5 // pred_check_branch
        %960 = sbr.rel (%p958) target = $region44
      $region43: #{tpu_custom_call.1} parent=5 // pred_region
        %s961 = ssub.s32 %s17, 2
        // Predicated region
        $region45: #{tpu_custom_call.1} parent=43 // pred_check
          %p962 = pneg %p114
        $region46: #{tpu_custom_call.1} parent=43 // pred_check_branch
          %964 = sbr.rel (%p962) target = $region48
        $region47: #{tpu_custom_call.1} parent=43 // pred_region
          %s965 = sand.u32 %s99, 1
          %s966 = scalar_lea.sflag [#allocation3], %s965
          %s967 = sand.u32 %s99, 1
          %s968 = smul.addr %s967, 36
          %s969 = scalar_lea.vmem [#allocation2], %s968
          %970 = dma.done %s966, 576
        $region48: #{tpu_custom_call.1} parent=43 // pred_fallthru
          _
        // Predicated region
        $region49: #{tpu_custom_call.1} parent=43 // pred_check
          %p971 = pneg %p140
        $region50: #{tpu_custom_call.1} parent=43 // pred_check_branch
          %973 = sbr.rel (%p971) target = $region52
        $region51: #{tpu_custom_call.1} parent=43 // pred_region
          %s974 = sand.u32 %s125, 1
          %s975 = scalar_lea.sflag [#allocation5], %s974
          %s976 = sand.u32 %s125, 1
          %s977 = smul.addr %s976, 2
          %s978 = scalar_lea.vmem [#allocation4], %s977
          %979 = dma.done %s975, 32
        $region52: #{tpu_custom_call.1} parent=43 // pred_fallthru
          _
      $region44: #{tpu_custom_call.1} parent=5 // pred_fallthru
        _
    $region6: #{tpu_custom_call.1} parent=1 // loop_footer
      %s21 = sadd.s32 1, %s17
    $region7: #{tpu_custom_call.1} parent=1 // loop_footer_branch
      %16 = sbr.rel target = $region3
    $region8: #{tpu_custom_call.1} parent=1 // loop_exit
      _
    %980 = vsyncpa [#allocation3], 1
    %s981 = scalar_lea.sflag [#allocation3], 1
    %982 = vsyncpa %s981, 1
    %983 = vsyncpa [#allocation5], 1
    %s984 = scalar_lea.sflag [#allocation5], 1
    %985 = vsyncpa %s984, 1

</llo_original>
